<compile_context>
chip_gen: v7x
topology: tpu7x:2x2x1
jax: 0.10.0
libtpu: 0.0.40
codegen_flags: <defaults>
</compile_context>

<pallas_src>
import math
import functools

import jax
import jax.numpy as jnp
from jax import lax
from jax.experimental import pallas as pl
from jax.experimental.pallas import tpu as pltpu


# ---------------------------------------------------------------------------
# Fused kernel: projections + multi-head attention + concat, one batch / step
# ---------------------------------------------------------------------------

def _fused_attn_kernel(y_ref, x_ref,
                       wq_ref, bq_ref, wkv_ref, bkv_ref,
                       o_ref, *, num_heads, dk, dv):
    # y_ref:   (Lq, E)          decoder side (queries)
    # x_ref:   (Lk, E)          encoder side (keys / values)
    # wq_ref:  (E, H*dk)        bq_ref:  (1, H*dk)
    # wkv_ref: (E, H*dk+H*dv)   bkv_ref: (1, H*dk+H*dv)   [K proj | V proj]
    # o_ref:   (Lq, H*dv)
    y = y_ref[...]
    x = x_ref[...]
    Hdk = num_heads * dk

    scale = 1.0 / math.sqrt(dk)

    # Projections on the MXU, f32 accumulation, bias broadcast over sublanes.
    # Fold the attention scale into q (one full-tile multiply, equivalent to
    # scaling every per-head score tile since the default mask is all-False).
    q = (jnp.dot(y, wq_ref[...], preferred_element_type=jnp.float32)
         + bq_ref[...]) * scale
    kv = jnp.dot(x, wkv_ref[...], preferred_element_type=jnp.float32) + bkv_ref[...]

    # Reference default mask is all-False -> masked_fill is a no-op.
    # TODO(synk): a user-supplied non-trivial attn_mask is not plumbed through.
    outs = []
    for h in range(num_heads):                      # static unroll, H is small
        q_h = q[:, h * dk:(h + 1) * dk]                         # (Lq, dk)
        k_h = kv[:, h * dk:(h + 1) * dk]                        # (Lk, dk)
        v_h = kv[:, Hdk + h * dv:Hdk + (h + 1) * dv]            # (Lk, dv)

        # Contract dk of q with dk of k directly (no transpose of k).
        s = lax.dot_general(q_h, k_h,
                            dimension_numbers=(((1,), (1,)), ((), ())),
                            preferred_element_type=jnp.float32)
        s = s - jnp.max(s, axis=-1, keepdims=True)  # stable softmax
        p = jnp.exp(s)
        denom = jnp.sum(p, axis=-1, keepdims=True)
        p = p * pl.reciprocal(denom, approx=True)   # EUP slot, not VALU divide

        outs.append(jnp.dot(p, v_h, preferred_element_type=jnp.float32))

    # Single store of the concatenated-heads layout.
    o_ref[...] = jnp.concatenate(outs, axis=-1).astype(o_ref.dtype)


def fused_encoder_decoder_attention(y, x, wq, bq2d, wkv, bkv2d,
                                    *, num_heads, dk, dv):
    B, Lq, E = y.shape
    Lk = x.shape[1]
    Hdk = num_heads * dk
    Hdv = num_heads * dv
    Hdkv = Hdk + Hdv

    kernel = functools.partial(_fused_attn_kernel,
                               num_heads=num_heads, dk=dk, dv=dv)

    return pl.pallas_call(
        kernel,
        out_shape=jax.ShapeDtypeStruct((B, Lq, Hdv), y.dtype),
        grid=(B,),
        in_specs=[
            pl.BlockSpec((None, Lq, E), lambda b: (b, 0, 0)),   # y (per batch)
            pl.BlockSpec((None, Lk, E), lambda b: (b, 0, 0)),   # x (per batch)
            pl.BlockSpec((E, Hdk), lambda b: (0, 0)),           # wq  (shared)
            pl.BlockSpec((1, Hdk), lambda b: (0, 0)),           # bq
            pl.BlockSpec((E, Hdkv), lambda b: (0, 0)),          # [wk | wv]
            pl.BlockSpec((1, Hdkv), lambda b: (0, 0)),          # [bk | bv]
        ],
        out_specs=pl.BlockSpec((None, Lq, Hdv), lambda b: (b, 0, 0)),
        compiler_params=pltpu.CompilerParams(
            dimension_semantics=("parallel",)),
    )(y, x, wq, bq2d, wkv, bkv2d)


# ---------------------------------------------------------------------------
# Module wrapper
# ---------------------------------------------------------------------------

class EncoderDecoderAttentionPallas:
    def __init__(self, embedding_dim, dk, dv, num_heads, key):
        self.embedding_dim = embedding_dim
        self.dk = dk
        self.dv = dv
        self.num_heads = num_heads
        ks = jax.random.split(key, 6)
        bound = 1.0 / math.sqrt(embedding_dim)  # torch.nn.Linear default init

        def init_w(k, out_feat):
            # stored as (in, out) == torch weight (out, in) transposed
            return jax.random.uniform(k, (embedding_dim, out_feat),
                                      jnp.float32, -bound, bound)

        def init_b(k, out_feat):
            return jax.random.uniform(k, (out_feat,), jnp.float32, -bound, bound)

        self.wq = init_w(ks[0], dk * num_heads)
        self.bq = init_b(ks[1], dk * num_heads)
        self.wk = init_w(ks[2], dk * num_heads)
        self.bk = init_b(ks[3], dk * num_heads)
        self.wv = init_w(ks[4], dv * num_heads)
        self.bv = init_b(ks[5], dv * num_heads)

        # Init-time prep for the kernel: fused K/V projection operands and
        # 2-D (sublane-broadcastable) biases.  Zero per-call cost.
        Hdk = dk * num_heads
        Hdv = dv * num_heads
        self._bq2d = self.bq.reshape(1, Hdk)
        self._wkv = jnp.concatenate([self.wk, self.wv], axis=1)          # (E, Hdk+Hdv)
        self._bkv2d = jnp.concatenate([self.bk, self.bv]).reshape(1, Hdk + Hdv)

    def __call__(self, y, x):
        # y: (B, Lq, E) decoder side (queries); x: (B, Lk, E) encoder side (K/V)
        return fused_encoder_decoder_attention(
            y, x, self.wq, self._bq2d, self._wkv, self._bkv2d,
            num_heads=self.num_heads, dk=self.dk, dv=self.dv)


# ---------------------------------------------------------------------------
# Pure-JAX reference (sanity check against the Pallas path)
# ---------------------------------------------------------------------------

def reference_forward(mod, y, x):
    B, Lq, E = y.shape
    Lk = x.shape[1]
    H, dk, dv = mod.num_heads, mod.dk, mod.dv
    q = y @ mod.wq + mod.bq
    k = x @ mod.wk + mod.bk
    v = x @ mod.wv + mod.bv
    qh = q.reshape(B, Lq, H, dk).transpose(0, 2, 1, 3)
    kh = k.reshape(B, Lk, H, dk).transpose(0, 2, 1, 3)
    vh = v.reshape(B, Lk, H, dv).transpose(0, 2, 1, 3)
    s = jnp.einsum("bhqd,bhkd->bhqk", qh, kh) / math.sqrt(dk)
    p = jax.nn.softmax(s, axis=-1)
    o = jnp.einsum("bhqk,bhkd->bhqd", p, vh)
    return o.transpose(0, 2, 1, 3).reshape(B, Lq, H * dv)


# ---------------------------------------------------------------------------
# Main
# ---------------------------------------------------------------------------

if __name__ == "__main__":
    key = jax.random.PRNGKey(0)
    k_param, k_y, k_x = jax.random.split(key, 3)

    batch = 2
    len_q = 8       # decoder sequence length
    len_k = 8       # encoder sequence length
    embedding_dim = 32
    dk = 8
    dv = 8
    num_heads = 4

    module = EncoderDecoderAttentionPallas(embedding_dim, dk, dv, num_heads, k_param)

    y = jax.random.normal(k_y, (batch, len_q, embedding_dim), jnp.float32)
    x = jax.random.normal(k_x, (batch, len_k, embedding_dim), jnp.float32)

    out = module(y, x)
    out = jax.block_until_ready(out)

    ref = jax.block_until_ready(reference_forward(module, y, x))
    assert out.shape == (batch, len_q, num_heads * dv), out.shape
    # Tolerance accounts for the EUP approx reciprocal in the softmax normalize.
    assert jnp.allclose(out, ref, atol=2e-3, rtol=2e-3), "mismatch vs reference"

    print("KERNEL_OK")
</pallas_src>

<mosaic_0001>
module attributes {stable_mosaic.version = 11 : i64} {
  func.func @_fused_attn_kernel(%arg0: i32, %arg1: memref<1x8x32xf32, #tpu.memory_space<vmem>>, %arg2: memref<1x8x32xf32, #tpu.memory_space<vmem>>, %arg3: memref<32x32xf32, #tpu.memory_space<vmem>>, %arg4: memref<1x32xf32, #tpu.memory_space<vmem>>, %arg5: memref<32x64xf32, #tpu.memory_space<vmem>>, %arg6: memref<1x64xf32, #tpu.memory_space<vmem>>, %arg7: memref<1x8x32xf32, #tpu.memory_space<vmem>>) attributes {dimension_semantics = [#tpu.dimension_semantics<parallel>], iteration_bounds = array<i64: 2>, scalar_prefetch = 0 : i64, scratch_operands = 0 : i64, tpu.core_type = #tpu.core_type<tc>, window_params = [{transform_indices = @transform_0, window_bounds = array<i64: 1, 8, 32>}, {transform_indices = @transform_1, window_bounds = array<i64: 1, 8, 32>}, {pipeline_mode = #tpu.pipeline_mode<synchronous>, transform_indices = @transform_2, window_bounds = array<i64: 32, 32>}, {pipeline_mode = #tpu.pipeline_mode<synchronous>, transform_indices = @transform_3, window_bounds = array<i64: 1, 32>}, {pipeline_mode = #tpu.pipeline_mode<synchronous>, transform_indices = @transform_4, window_bounds = array<i64: 32, 64>}, {pipeline_mode = #tpu.pipeline_mode<synchronous>, transform_indices = @transform_5, window_bounds = array<i64: 1, 64>}, {transform_indices = @transform_6, window_bounds = array<i64: 1, 8, 32>}]} {
    %c0 = arith.constant 0 : index
    %c0_0 = arith.constant 0 : index
    %c0_1 = arith.constant 0 : index
    %0 = vector.load %arg1[%c0, %c0_0, %c0_1] : memref<1x8x32xf32, #tpu.memory_space<vmem>>, vector<1x8x32xf32>
    %1 = vector.shape_cast %0 : vector<1x8x32xf32> to vector<8x32xf32>
    %c0_2 = arith.constant 0 : index
    %c0_3 = arith.constant 0 : index
    %c0_4 = arith.constant 0 : index
    %2 = vector.load %arg2[%c0_2, %c0_3, %c0_4] : memref<1x8x32xf32, #tpu.memory_space<vmem>>, vector<1x8x32xf32>
    %3 = vector.shape_cast %2 : vector<1x8x32xf32> to vector<8x32xf32>
    %c0_5 = arith.constant 0 : index
    %c0_6 = arith.constant 0 : index
    %4 = vector.load %arg3[%c0_5, %c0_6] : memref<32x32xf32, #tpu.memory_space<vmem>>, vector<32x32xf32>
    %cst = arith.constant dense<0.000000e+00> : vector<8x32xf32>
    %5 = tpu.matmul %1, %4, %cst {dimension_numbers = #tpu.dot_dimension_numbers<[1], [0], [0], [1], [0, 0, 1, 1], [], []>} : vector<8x32xf32>, vector<32x32xf32>, vector<8x32xf32> -> vector<8x32xf32>
    %c0_7 = arith.constant 0 : index
    %c0_8 = arith.constant 0 : index
    %6 = vector.load %arg4[%c0_7, %c0_8] : memref<1x32xf32, #tpu.memory_space<vmem>>, vector<1x32xf32>
    %7 = vector.broadcast %6 : vector<1x32xf32> to vector<8x32xf32>
    %8 = arith.addf %5, %7 : vector<8x32xf32>
    %cst_9 = arith.constant 0.353553385 : f32
    %9 = vector.broadcast %cst_9 : f32 to vector<8x32xf32>
    %10 = arith.mulf %8, %9 : vector<8x32xf32>
    %c0_10 = arith.constant 0 : index
    %c0_11 = arith.constant 0 : index
    %11 = vector.load %arg5[%c0_10, %c0_11] : memref<32x64xf32, #tpu.memory_space<vmem>>, vector<32x64xf32>
    %cst_12 = arith.constant dense<0.000000e+00> : vector<8x64xf32>
    %12 = tpu.matmul %3, %11, %cst_12 {dimension_numbers = #tpu.dot_dimension_numbers<[1], [0], [0], [1], [0, 0, 1, 1], [], []>} : vector<8x32xf32>, vector<32x64xf32>, vector<8x64xf32> -> vector<8x64xf32>
    %c0_13 = arith.constant 0 : index
    %c0_14 = arith.constant 0 : index
    %13 = vector.load %arg6[%c0_13, %c0_14] : memref<1x64xf32, #tpu.memory_space<vmem>>, vector<1x64xf32>
    %14 = vector.broadcast %13 : vector<1x64xf32> to vector<8x64xf32>
    %15 = arith.addf %12, %14 : vector<8x64xf32>
    %16 = vector.extract_strided_slice %10 {offsets = [0, 0], sizes = [8, 8], strides = [1, 1]} : vector<8x32xf32> to vector<8x8xf32>
    %17 = vector.extract_strided_slice %15 {offsets = [0, 0], sizes = [8, 8], strides = [1, 1]} : vector<8x64xf32> to vector<8x8xf32>
    %18 = vector.extract_strided_slice %15 {offsets = [0, 32], sizes = [8, 8], strides = [1, 1]} : vector<8x64xf32> to vector<8x8xf32>
    %cst_15 = arith.constant dense<0.000000e+00> : vector<8x8xf32>
    %19 = tpu.matmul %16, %17, %cst_15 {dimension_numbers = #tpu.dot_dimension_numbers<[1], [1], [0], [0], [0, 0, 1, 0], [], []>} : vector<8x8xf32>, vector<8x8xf32>, vector<8x8xf32> -> vector<8x8xf32>
    %cst_16 = arith.constant dense<0xFF800000> : vector<8xf32>
    %20 = vector.multi_reduction <maximumf>, %19, %cst_16 [1] : vector<8x8xf32> to vector<8xf32>
    %21 = vector.shape_cast %20 : vector<8xf32> to vector<8x1xf32>
    %22 = vector.broadcast %21 : vector<8x1xf32> to vector<8x8xf32>
    %23 = arith.subf %19, %22 : vector<8x8xf32>
    %24 = math.exp %23 : vector<8x8xf32>
    %cst_17 = arith.constant dense<0.000000e+00> : vector<8xf32>
    %25 = vector.multi_reduction <add>, %24, %cst_17 [1] : vector<8x8xf32> to vector<8xf32>
    %26 = vector.shape_cast %25 : vector<8xf32> to vector<8x1xf32>
    %27 = tpu.reciprocal %26 {approx = true} : vector<8x1xf32> -> vector<8x1xf32>
    %28 = vector.broadcast %27 : vector<8x1xf32> to vector<8x8xf32>
    %29 = arith.mulf %24, %28 : vector<8x8xf32>
    %cst_18 = arith.constant dense<0.000000e+00> : vector<8x8xf32>
    %30 = tpu.matmul %29, %18, %cst_18 {dimension_numbers = #tpu.dot_dimension_numbers<[1], [0], [0], [1], [0, 0, 1, 1], [], []>} : vector<8x8xf32>, vector<8x8xf32>, vector<8x8xf32> -> vector<8x8xf32>
    %31 = vector.extract_strided_slice %10 {offsets = [0, 8], sizes = [8, 8], strides = [1, 1]} : vector<8x32xf32> to vector<8x8xf32>
    %32 = vector.extract_strided_slice %15 {offsets = [0, 8], sizes = [8, 8], strides = [1, 1]} : vector<8x64xf32> to vector<8x8xf32>
    %33 = vector.extract_strided_slice %15 {offsets = [0, 40], sizes = [8, 8], strides = [1, 1]} : vector<8x64xf32> to vector<8x8xf32>
    %cst_19 = arith.constant dense<0.000000e+00> : vector<8x8xf32>
    %34 = tpu.matmul %31, %32, %cst_19 {dimension_numbers = #tpu.dot_dimension_numbers<[1], [1], [0], [0], [0, 0, 1, 0], [], []>} : vector<8x8xf32>, vector<8x8xf32>, vector<8x8xf32> -> vector<8x8xf32>
    %cst_20 = arith.constant dense<0xFF800000> : vector<8xf32>
    %35 = vector.multi_reduction <maximumf>, %34, %cst_20 [1] : vector<8x8xf32> to vector<8xf32>
    %36 = vector.shape_cast %35 : vector<8xf32> to vector<8x1xf32>
    %37 = vector.broadcast %36 : vector<8x1xf32> to vector<8x8xf32>
    %38 = arith.subf %34, %37 : vector<8x8xf32>
    %39 = math.exp %38 : vector<8x8xf32>
    %cst_21 = arith.constant dense<0.000000e+00> : vector<8xf32>
    %40 = vector.multi_reduction <add>, %39, %cst_21 [1] : vector<8x8xf32> to vector<8xf32>
    %41 = vector.shape_cast %40 : vector<8xf32> to vector<8x1xf32>
    %42 = tpu.reciprocal %41 {approx = true} : vector<8x1xf32> -> vector<8x1xf32>
    %43 = vector.broadcast %42 : vector<8x1xf32> to vector<8x8xf32>
    %44 = arith.mulf %39, %43 : vector<8x8xf32>
    %cst_22 = arith.constant dense<0.000000e+00> : vector<8x8xf32>
    %45 = tpu.matmul %44, %33, %cst_22 {dimension_numbers = #tpu.dot_dimension_numbers<[1], [0], [0], [1], [0, 0, 1, 1], [], []>} : vector<8x8xf32>, vector<8x8xf32>, vector<8x8xf32> -> vector<8x8xf32>
    %46 = vector.extract_strided_slice %10 {offsets = [0, 16], sizes = [8, 8], strides = [1, 1]} : vector<8x32xf32> to vector<8x8xf32>
    %47 = vector.extract_strided_slice %15 {offsets = [0, 16], sizes = [8, 8], strides = [1, 1]} : vector<8x64xf32> to vector<8x8xf32>
    %48 = vector.extract_strided_slice %15 {offsets = [0, 48], sizes = [8, 8], strides = [1, 1]} : vector<8x64xf32> to vector<8x8xf32>
    %cst_23 = arith.constant dense<0.000000e+00> : vector<8x8xf32>
    %49 = tpu.matmul %46, %47, %cst_23 {dimension_numbers = #tpu.dot_dimension_numbers<[1], [1], [0], [0], [0, 0, 1, 0], [], []>} : vector<8x8xf32>, vector<8x8xf32>, vector<8x8xf32> -> vector<8x8xf32>
    %cst_24 = arith.constant dense<0xFF800000> : vector<8xf32>
    %50 = vector.multi_reduction <maximumf>, %49, %cst_24 [1] : vector<8x8xf32> to vector<8xf32>
    %51 = vector.shape_cast %50 : vector<8xf32> to vector<8x1xf32>
    %52 = vector.broadcast %51 : vector<8x1xf32> to vector<8x8xf32>
    %53 = arith.subf %49, %52 : vector<8x8xf32>
    %54 = math.exp %53 : vector<8x8xf32>
    %cst_25 = arith.constant dense<0.000000e+00> : vector<8xf32>
    %55 = vector.multi_reduction <add>, %54, %cst_25 [1] : vector<8x8xf32> to vector<8xf32>
    %56 = vector.shape_cast %55 : vector<8xf32> to vector<8x1xf32>
    %57 = tpu.reciprocal %56 {approx = true} : vector<8x1xf32> -> vector<8x1xf32>
    %58 = vector.broadcast %57 : vector<8x1xf32> to vector<8x8xf32>
    %59 = arith.mulf %54, %58 : vector<8x8xf32>
    %cst_26 = arith.constant dense<0.000000e+00> : vector<8x8xf32>
    %60 = tpu.matmul %59, %48, %cst_26 {dimension_numbers = #tpu.dot_dimension_numbers<[1], [0], [0], [1], [0, 0, 1, 1], [], []>} : vector<8x8xf32>, vector<8x8xf32>, vector<8x8xf32> -> vector<8x8xf32>
    %61 = vector.extract_strided_slice %10 {offsets = [0, 24], sizes = [8, 8], strides = [1, 1]} : vector<8x32xf32> to vector<8x8xf32>
    %62 = vector.extract_strided_slice %15 {offsets = [0, 24], sizes = [8, 8], strides = [1, 1]} : vector<8x64xf32> to vector<8x8xf32>
    %63 = vector.extract_strided_slice %15 {offsets = [0, 56], sizes = [8, 8], strides = [1, 1]} : vector<8x64xf32> to vector<8x8xf32>
    %cst_27 = arith.constant dense<0.000000e+00> : vector<8x8xf32>
    %64 = tpu.matmul %61, %62, %cst_27 {dimension_numbers = #tpu.dot_dimension_numbers<[1], [1], [0], [0], [0, 0, 1, 0], [], []>} : vector<8x8xf32>, vector<8x8xf32>, vector<8x8xf32> -> vector<8x8xf32>
    %cst_28 = arith.constant dense<0xFF800000> : vector<8xf32>
    %65 = vector.multi_reduction <maximumf>, %64, %cst_28 [1] : vector<8x8xf32> to vector<8xf32>
    %66 = vector.shape_cast %65 : vector<8xf32> to vector<8x1xf32>
    %67 = vector.broadcast %66 : vector<8x1xf32> to vector<8x8xf32>
    %68 = arith.subf %64, %67 : vector<8x8xf32>
    %69 = math.exp %68 : vector<8x8xf32>
    %cst_29 = arith.constant dense<0.000000e+00> : vector<8xf32>
    %70 = vector.multi_reduction <add>, %69, %cst_29 [1] : vector<8x8xf32> to vector<8xf32>
    %71 = vector.shape_cast %70 : vector<8xf32> to vector<8x1xf32>
    %72 = tpu.reciprocal %71 {approx = true} : vector<8x1xf32> -> vector<8x1xf32>
    %73 = vector.broadcast %72 : vector<8x1xf32> to vector<8x8xf32>
    %74 = arith.mulf %69, %73 : vector<8x8xf32>
    %cst_30 = arith.constant dense<0.000000e+00> : vector<8x8xf32>
    %75 = tpu.matmul %74, %63, %cst_30 {dimension_numbers = #tpu.dot_dimension_numbers<[1], [0], [0], [1], [0, 0, 1, 1], [], []>} : vector<8x8xf32>, vector<8x8xf32>, vector<8x8xf32> -> vector<8x8xf32>
    %76 = tpu.concatenate %30, %45, %60, %75 in 1 : vector<8x8xf32>, vector<8x8xf32>, vector<8x8xf32>, vector<8x8xf32> -> vector<8x32xf32>
    %c0_31 = arith.constant 0 : index
    %c0_32 = arith.constant 0 : index
    %c0_33 = arith.constant 0 : index
    %77 = vector.load %arg7[%c0_31, %c0_32, %c0_33] : memref<1x8x32xf32, #tpu.memory_space<vmem>>, vector<1x8x32xf32>
    %78 = vector.shape_cast %77 : vector<1x8x32xf32> to vector<8x32xf32>
    %79 = vector.shape_cast %76 : vector<8x32xf32> to vector<1x8x32xf32>
    tpu.vector_store %arg7[%c0_31, %c0_32, %c0_33], %79 {strides = array<i32>} : memref<1x8x32xf32, #tpu.memory_space<vmem>>, vector<1x8x32xf32>,
    return
  }
  func.func @transform_0(%arg0: i32) -> (i32, i32, i32) {
    %c0_i32 = arith.constant 0 : i32
    %c0_i32_0 = arith.constant 0 : i32
    %c0_i32_1 = arith.constant 0 : i32
    return %arg0, %c0_i32, %c0_i32_0 : i32, i32, i32
  }
  func.func @transform_1(%arg0: i32) -> (i32, i32, i32) {
    %c0_i32 = arith.constant 0 : i32
    %c0_i32_0 = arith.constant 0 : i32
    %c0_i32_1 = arith.constant 0 : i32
    return %arg0, %c0_i32, %c0_i32_0 : i32, i32, i32
  }
  func.func @transform_2(%arg0: i32) -> (i32, i32) {
    %c0_i32 = arith.constant 0 : i32
    %c0_i32_0 = arith.constant 0 : i32
    %c0_i32_1 = arith.constant 0 : i32
    return %c0_i32, %c0_i32_0 : i32, i32
  }
  func.func @transform_3(%arg0: i32) -> (i32, i32) {
    %c0_i32 = arith.constant 0 : i32
    %c0_i32_0 = arith.constant 0 : i32
    %c0_i32_1 = arith.constant 0 : i32
    return %c0_i32, %c0_i32_0 : i32, i32
  }
  func.func @transform_4(%arg0: i32) -> (i32, i32) {
    %c0_i32 = arith.constant 0 : i32
    %c0_i32_0 = arith.constant 0 : i32
    %c0_i32_1 = arith.constant 0 : i32
    return %c0_i32, %c0_i32_0 : i32, i32
  }
  func.func @transform_5(%arg0: i32) -> (i32, i32) {
    %c0_i32 = arith.constant 0 : i32
    %c0_i32_0 = arith.constant 0 : i32
    %c0_i32_1 = arith.constant 0 : i32
    return %c0_i32, %c0_i32_0 : i32, i32
  }
  func.func @transform_6(%arg0: i32) -> (i32, i32, i32) {
    %c0_i32 = arith.constant 0 : i32
    %c0_i32_0 = arith.constant 0 : i32
    %c0_i32_1 = arith.constant 0 : i32
    return %arg0, %c0_i32, %c0_i32_0 : i32, i32, i32
  }
}

</mosaic_0001>

<llo_original>
// kernel: tpu_custom_call.1
$region0: #{tpu_custom_call.1}
  #allocation0 [shape = 'u32[]', space=smem, size = 0x4, offset = 0x4, fixed_abs, tag = 'smem constant byte address 0x4 - core index']
  #allocation1 [shape = 'u32[144,128]{1,0:T(1,128)}', space=vmem, size = 0x12000, scoped, tag = 'internal scratch']
  %s0 = inlined_call_operand.hbm [shape: f32[2,8,32], index: 0, kind: input, shape index: {}]
  %s1 = inlined_call_operand.hbm [shape: f32[2,8,32], index: 1, kind: input, shape index: {}]
  %s2 = inlined_call_operand.hbm [shape: f32[32,32], index: 2, kind: input, shape index: {}]
  %s3 = inlined_call_operand.vmem [shape: f32[1,32], index: 3, kind: input, shape index: {}]
  %s4 = inlined_call_operand.hbm [shape: f32[32,64], index: 4, kind: input, shape index: {}]
  %s5 = inlined_call_operand.vmem [shape: f32[1,64], index: 5, kind: input, shape index: {}]
  %s6 = inlined_call_operand.hbm [shape: f32[2,8,32], index: 6, kind: output, shape index: {}]
  %s7 = sld [smem:[#allocation0]]
  $region73: #{tpu_custom_call.1} parent=0
    _
  %s9 = ssub.s32 1, %s7
  %s10 = scalar_select 0, %s9, %s7
  $region1: #{tpu_custom_call.1} parent=0
    #allocation2 [shape = 'u8[8192]{0}', space=vmem, size = 0x2000, scoped, tag = 'input window, operand 0']
    #allocation3 [shape = 's32[2]{0}', space=sflag, size = 0x8, scoped, tag = 'scoped memory for tpu_custom_call.1']
    #allocation4 [shape = 's32[2]{0}', space=sflag, size = 0x8, scoped, tag = 'scoped memory for tpu_custom_call.1']
    #allocation5 [shape = 'u8[8192]{0}', space=vmem, size = 0x2000, scoped, tag = 'input window, operand 1']
    #allocation6 [shape = 's32[2]{0}', space=sflag, size = 0x8, scoped, tag = 'scoped memory for tpu_custom_call.1']
    #allocation7 [shape = 'u8[16384]{0}', space=vmem, size = 0x4000, scoped, tag = 'input window, operand 2, single buffered']
    #allocation8 [shape = 'u8[16384]{0}', space=vmem, size = 0x4000, scoped, tag = 'input window, operand 4, single buffered']
    #allocation9 [shape = 's32[1]{0}', space=sflag, size = 0x4, scoped, tag = 'scoped memory for tpu_custom_call.1']
    #allocation10 [shape = 'u8[8192]{0}', space=vmem, size = 0x2000, scoped, tag = 'output window, operand 0']
    %11 = vsyncpa [#allocation3], 0
    %s12 = scalar_lea.sflag [#allocation3], 1
    %13 = vsyncpa %s12, 0
    %14 = vsyncpa [#allocation6], 0
    %s15 = scalar_lea.sflag [#allocation6], 1
    %16 = vsyncpa %s15, 0
    %17 = vsyncpa [#allocation9], 0
    %18 = vsyncpa [#allocation4], 0
    %s19 = scalar_lea.sflag [#allocation4], 1
    %20 = vsyncpa %s19, 0
    loop: start=0, step=1, limit=4
    $region2: #{tpu_custom_call.1} parent=1 // loop_pre_header
      _
    $region3: #{tpu_custom_call.1} parent=1 // loop_header
      %s22 = sphi 0, %s26
      %p23 = scmp.ge.s32.totalorder %s22, 4
      %s32 = sphi 0, %s34
      %s35 = sphi 0, %s32
      %s36 = sphi 0, %s35
      %s52 = sphi 0, %s36
      %s58 = sphi 0, %s60
      %s61 = sphi 0, %s58
      %s62 = sphi 0, %s61
      %s78 = sphi 0, %s62
      %s82 = sphi 0, %s82
      %s84 = sphi 0, %s82
      %s85 = sphi 0, %s84
      %s99 = sphi 0, %s85
      %s103 = sphi 0, %s103
      %s105 = sphi 0, %s103
      %s106 = sphi 0, %s105
      %s120 = sphi 0, %s106
      %s124 = sphi 0, %s124
      %s126 = sphi 0, %s124
      %s127 = sphi 0, %s126
      %s141 = sphi 0, %s127
      %s145 = sphi 0, %s145
      %s147 = sphi 0, %s145
      %s148 = sphi 0, %s147
      %s162 = sphi 0, %s148
      %s168 = sphi 0, %s170
      %s171 = sphi 0, %s168
      %s172 = sphi 0, %s171
      %s188 = sphi 0, %s172
    $region4: #{tpu_custom_call.1} parent=1 // loop_header_branch
      %25 = sbr.rel (%p23) target = $region8
    $region5: #{tpu_custom_call.1} parent=1 // loop_body
      %s27 = ssub.s32 %s22, 1
      %s28 = ssub.s32 %s22, 2
      %s29 = sadd.s32 %s22, 1
      %s30 = ssub.s32 %s22, %s29
      %p31 = scmp.eq.s32.totalorder %s30, 0
      %s33 = sadd.s32 %s32, 1
      %s34 = scalar_select %p31, %s32, %s33
      %p37 = pneg %p31
      %p38 = scmp.eq.s32.totalorder %s22, 1
      %p39 = por %p37, %p38
      %p40 = scmp.ne.s32.totalorder %s32, %s35
      %p41 = scmp.eq.s32.totalorder %s22, 0
      %p42 = por %p40, %p41
      %p43 = scmp.ne.s32.totalorder %s32, %s35
      %p44 = scmp.eq.s32.totalorder %s27, 1
      %p45 = por %p43, %p44
      %p46 = scmp.ne.s32.totalorder %s35, %s36
      %p47 = scmp.eq.s32.totalorder %s27, 0
      %p48 = por %p46, %p47
      %p49 = scmp.ne.s32.totalorder %s35, %s36
      %p50 = scmp.eq.s32.totalorder %s28, 1
      %p51 = por %p49, %p50
      %p53 = scmp.ne.s32.totalorder %s36, %s52
      %p54 = scmp.eq.s32.totalorder %s28, 0
      %p55 = por %p53, %p54
      %s56 = ssub.s32 %s22, %s29
      %p57 = scmp.eq.s32.totalorder %s56, 0
      %s59 = sadd.s32 %s58, 1
      %s60 = scalar_select %p57, %s58, %s59
      %p63 = pneg %p57
      %p64 = scmp.eq.s32.totalorder %s22, 1
      %p65 = por %p63, %p64
      %p66 = scmp.ne.s32.totalorder %s58, %s61
      %p67 = scmp.eq.s32.totalorder %s22, 0
      %p68 = por %p66, %p67
      %p69 = scmp.ne.s32.totalorder %s58, %s61
      %p70 = scmp.eq.s32.totalorder %s27, 1
      %p71 = por %p69, %p70
      %p72 = scmp.ne.s32.totalorder %s61, %s62
      %p73 = scmp.eq.s32.totalorder %s27, 0
      %p74 = por %p72, %p73
      %p75 = scmp.ne.s32.totalorder %s61, %s62
      %p76 = scmp.eq.s32.totalorder %s28, 1
      %p77 = por %p75, %p76
      %p79 = scmp.ne.s32.totalorder %s62, %s78
      %p80 = scmp.eq.s32.totalorder %s28, 0
      %p81 = por %p79, %p80
      %s83 = sadd.s32 %s82, 1
      %p86 = scmp.eq.s32.totalorder %s22, 1
      %p87 = scmp.ne.s32.totalorder %s82, %s84
      %p88 = scmp.eq.s32.totalorder %s22, 0
      %p89 = por %p87, %p88
      %p90 = scmp.ne.s32.totalorder %s82, %s84
      %p91 = scmp.eq.s32.totalorder %s27, 1
      %p92 = por %p90, %p91
      %p93 = scmp.ne.s32.totalorder %s84, %s85
      %p94 = scmp.eq.s32.totalorder %s27, 0
      %p95 = por %p93, %p94
      %p96 = scmp.ne.s32.totalorder %s84, %s85
      %p97 = scmp.eq.s32.totalorder %s28, 1
      %p98 = por %p96, %p97
      %p100 = scmp.ne.s32.totalorder %s85, %s99
      %p101 = scmp.eq.s32.totalorder %s28, 0
      %p102 = por %p100, %p101
      %s104 = sadd.s32 %s103, 1
      %p107 = scmp.eq.s32.totalorder %s22, 1
      %p108 = scmp.ne.s32.totalorder %s103, %s105
      %p109 = scmp.eq.s32.totalorder %s22, 0
      %p110 = por %p108, %p109
      %p111 = scmp.ne.s32.totalorder %s103, %s105
      %p112 = scmp.eq.s32.totalorder %s27, 1
      %p113 = por %p111, %p112
      %p114 = scmp.ne.s32.totalorder %s105, %s106
      %p115 = scmp.eq.s32.totalorder %s27, 0
      %p116 = por %p114, %p115
      %p117 = scmp.ne.s32.totalorder %s105, %s106
      %p118 = scmp.eq.s32.totalorder %s28, 1
      %p119 = por %p117, %p118
      %p121 = scmp.ne.s32.totalorder %s106, %s120
      %p122 = scmp.eq.s32.totalorder %s28, 0
      %p123 = por %p121, %p122
      %s125 = sadd.s32 %s124, 1
      %p128 = scmp.eq.s32.totalorder %s22, 1
      %p129 = scmp.ne.s32.totalorder %s124, %s126
      %p130 = scmp.eq.s32.totalorder %s22, 0
      %p131 = por %p129, %p130
      %p132 = scmp.ne.s32.totalorder %s124, %s126
      %p133 = scmp.eq.s32.totalorder %s27, 1
      %p134 = por %p132, %p133
      %p135 = scmp.ne.s32.totalorder %s126, %s127
      %p136 = scmp.eq.s32.totalorder %s27, 0
      %p137 = por %p135, %p136
      %p138 = scmp.ne.s32.totalorder %s126, %s127
      %p139 = scmp.eq.s32.totalorder %s28, 1
      %p140 = por %p138, %p139
      %p142 = scmp.ne.s32.totalorder %s127, %s141
      %p143 = scmp.eq.s32.totalorder %s28, 0
      %p144 = por %p142, %p143
      %s146 = sadd.s32 %s145, 1
      %p149 = scmp.eq.s32.totalorder %s22, 1
      %p150 = scmp.ne.s32.totalorder %s145, %s147
      %p151 = scmp.eq.s32.totalorder %s22, 0
      %p152 = por %p150, %p151
      %p153 = scmp.ne.s32.totalorder %s145, %s147
      %p154 = scmp.eq.s32.totalorder %s27, 1
      %p155 = por %p153, %p154
      %p156 = scmp.ne.s32.totalorder %s147, %s148
      %p157 = scmp.eq.s32.totalorder %s27, 0
      %p158 = por %p156, %p157
      %p159 = scmp.ne.s32.totalorder %s147, %s148
      %p160 = scmp.eq.s32.totalorder %s28, 1
      %p161 = por %p159, %p160
      %p163 = scmp.ne.s32.totalorder %s148, %s162
      %p164 = scmp.eq.s32.totalorder %s28, 0
      %p165 = por %p163, %p164
      %s166 = ssub.s32 %s22, %s29
      %p167 = scmp.eq.s32.totalorder %s166, 0
      %s169 = sadd.s32 %s168, 1
      %s170 = scalar_select %p167, %s168, %s169
      %p173 = pneg %p167
      %p174 = scmp.eq.s32.totalorder %s22, 1
      %p175 = por %p173, %p174
      %p176 = scmp.ne.s32.totalorder %s168, %s171
      %p177 = scmp.eq.s32.totalorder %s22, 0
      %p178 = por %p176, %p177
      %p179 = scmp.ne.s32.totalorder %s168, %s171
      %p180 = scmp.eq.s32.totalorder %s27, 1
      %p181 = por %p179, %p180
      %p182 = scmp.ne.s32.totalorder %s171, %s172
      %p183 = scmp.eq.s32.totalorder %s27, 0
      %p184 = por %p182, %p183
      %p185 = scmp.ne.s32.totalorder %s171, %s172
      %p186 = scmp.eq.s32.totalorder %s28, 1
      %p187 = por %p185, %p186
      %p189 = scmp.ne.s32.totalorder %s172, %s188
      %p190 = scmp.eq.s32.totalorder %s28, 0
      %p191 = por %p189, %p190
      %p192 = scmp.le.s32.totalorder 1, %s22
      %p193 = scmp.lt.s32.totalorder %s22, 3
      %p194 = pnand %p192, %p193
      %p195 = pneg %p194
      // Predicated region
      $region9: #{tpu_custom_call.1} parent=5 // pred_check
        _
      $region10: #{tpu_custom_call.1} parent=5 // pred_check_branch
        %197 = sbr.rel (%p194) target = $region12
      $region11: #{tpu_custom_call.1} parent=5 // pred_region
        %s198 = ssub.s32 %s22, 1
        // Predicated region
        $region13: #{tpu_custom_call.1} parent=11 // pred_check
          %p199 = pneg %p95
        $region14: #{tpu_custom_call.1} parent=11 // pred_check_branch
          %201 = sbr.rel (%p199) target = $region16
        $region15: #{tpu_custom_call.1} parent=11 // pred_region
          %s203 = ssub.s32 512, 512
          %204 = vsyncadd [#allocation6], %s203
          %s205 = sshll.u32 [#allocation7], 4
          %s206 = int_to_ptr.vmem [resolvable:$true] %s205
          %211 = dma.hbm_to_vmem [thread:$0]  %s2, 512, %s206, [#allocation6], 128, 128, 8
        $region16: #{tpu_custom_call.1} parent=11 // pred_fallthru
          _
        // Predicated region
        $region17: #{tpu_custom_call.1} parent=11 // pred_check
          %p212 = pneg %p116
        $region18: #{tpu_custom_call.1} parent=11 // pred_check_branch
          %214 = sbr.rel (%p212) target = $region20
        $region19: #{tpu_custom_call.1} parent=11 // pred_region
          _
        $region20: #{tpu_custom_call.1} parent=11 // pred_fallthru
          _
        // Predicated region
        $region21: #{tpu_custom_call.1} parent=11 // pred_check
          %p215 = pneg %p137
        $region22: #{tpu_custom_call.1} parent=11 // pred_check_branch
          %217 = sbr.rel (%p215) target = $region24
        $region23: #{tpu_custom_call.1} parent=11 // pred_region
          %s219 = ssub.s32 512, 512
          %220 = vsyncadd [#allocation9], %s219
          %s221 = sshll.u32 [#allocation8], 4
          %s222 = int_to_ptr.vmem [resolvable:$true] %s221
          %227 = dma.hbm_to_vmem [thread:$0]  %s4, 512, %s222, [#allocation9], 128, 128, 8
        $region24: #{tpu_custom_call.1} parent=11 // pred_fallthru
          _
        // Predicated region
        $region25: #{tpu_custom_call.1} parent=11 // pred_check
          %p228 = pneg %p158
        $region26: #{tpu_custom_call.1} parent=11 // pred_check_branch
          %230 = sbr.rel (%p228) target = $region28
        $region27: #{tpu_custom_call.1} parent=11 // pred_region
          _
        $region28: #{tpu_custom_call.1} parent=11 // pred_fallthru
          _
      $region12: #{tpu_custom_call.1} parent=5 // pred_fallthru
        _
      %p231 = scmp.lt.s32.totalorder %s22, 2
      // Predicated region
      $region29: #{tpu_custom_call.1} parent=5 // pred_check
        %p232 = pneg %p231
      $region30: #{tpu_custom_call.1} parent=5 // pred_check_branch
        %234 = sbr.rel (%p232) target = $region32
      $region31: #{tpu_custom_call.1} parent=5 // pred_region
        // Predicated region
        $region33: #{tpu_custom_call.1} parent=31 // pred_check
          %p235 = pneg %p42
        $region34: #{tpu_custom_call.1} parent=31 // pred_check_branch
          %237 = sbr.rel (%p235) target = $region36
        $region35: #{tpu_custom_call.1} parent=31 // pred_region
          %s238 = sand.u32 %s32, 1
          %s239 = scalar_lea.sflag [#allocation3], %s238
          %s240 = sand.u32 %s32, 1
          %s241 = smul.addr %s240, 8
          %s242 = scalar_lea.vmem [#allocation2], %s241
          %s244 = ssub.s32 128, 128
          %245 = vsyncadd %s239, %s244
          %s246 = smul.addr %s22, 128
          %s247 = scalar_lea.hbm %s0, %s246
          %s249 = sshll.u32 %s242, 4
          %s250 = int_to_ptr.vmem [resolvable:$true] %s249
          %252 = dma.hbm_to_vmem [thread:$0]  %s247, 128, %s250, %s239
        $region36: #{tpu_custom_call.1} parent=31 // pred_fallthru
          _
        // Predicated region
        $region37: #{tpu_custom_call.1} parent=31 // pred_check
          %p253 = pneg %p68
        $region38: #{tpu_custom_call.1} parent=31 // pred_check_branch
          %255 = sbr.rel (%p253) target = $region40
        $region39: #{tpu_custom_call.1} parent=31 // pred_region
          %s256 = sand.u32 %s22, 1
          %s257 = scalar_lea.sflag [#allocation6], %s256
          %s258 = sand.u32 %s58, 1
          %s259 = smul.addr %s258, 8
          %s260 = scalar_lea.vmem [#allocation5], %s259
          %s262 = ssub.s32 128, 128
          %263 = vsyncadd %s257, %s262
          %s264 = smul.addr %s22, 128
          %s265 = scalar_lea.hbm %s1, %s264
          %s267 = sshll.u32 %s260, 4
          %s268 = int_to_ptr.vmem [resolvable:$true] %s267
          %270 = dma.hbm_to_vmem [thread:$0]  %s265, 128, %s268, %s257
        $region40: #{tpu_custom_call.1} parent=31 // pred_fallthru
          _
      $region32: #{tpu_custom_call.1} parent=5 // pred_fallthru
        _
      %p271 = scmp.le.s32.totalorder 1, %s22
      %p272 = scmp.lt.s32.totalorder %s22, 3
      %p273 = pnand %p271, %p272
      %p274 = pneg %p273
      // Predicated region
      $region41: #{tpu_custom_call.1} parent=5 // pred_check
        _
      $region42: #{tpu_custom_call.1} parent=5 // pred_check_branch
        %276 = sbr.rel (%p273) target = $region44
      $region43: #{tpu_custom_call.1} parent=5 // pred_region
        %s277 = ssub.s32 %s22, 1
        %s278 = sand.u32 %s35, 1
        %s279 = scalar_lea.sflag [#allocation3], %s278
        %s280 = sand.u32 %s35, 1
        %s281 = smul.addr %s280, 8
        %s282 = scalar_lea.vmem [#allocation2], %s281
        // Predicated region
        $region45: #{tpu_custom_call.1} parent=43 // pred_check
          %p283 = pneg %p48
        $region46: #{tpu_custom_call.1} parent=43 // pred_check_branch
          %285 = sbr.rel (%p283) target = $region48
        $region47: #{tpu_custom_call.1} parent=43 // pred_region
          %286 = dma.done %s279, 128
        $region48: #{tpu_custom_call.1} parent=43 // pred_fallthru
          _
        %s287 = sand.u32 %s27, 1
        %s288 = scalar_lea.sflag [#allocation6], %s287
        %s289 = sand.u32 %s61, 1
        %s290 = smul.addr %s289, 8
        %s291 = scalar_lea.vmem [#allocation5], %s290
        // Predicated region
        $region49: #{tpu_custom_call.1} parent=43 // pred_check
          %p292 = pneg %p74
        $region50: #{tpu_custom_call.1} parent=43 // pred_check_branch
          %294 = sbr.rel (%p292) target = $region52
        $region51: #{tpu_custom_call.1} parent=43 // pred_region
          %295 = dma.done %s288, 128
        $region52: #{tpu_custom_call.1} parent=43 // pred_fallthru
          _
        // Predicated region
        $region53: #{tpu_custom_call.1} parent=43 // pred_check
          %p296 = pneg %p95
        $region54: #{tpu_custom_call.1} parent=43 // pred_check_branch
          %298 = sbr.rel (%p296) target = $region56
        $region55: #{tpu_custom_call.1} parent=43 // pred_region
          %299 = dma.done [#allocation6], 512
        $region56: #{tpu_custom_call.1} parent=43 // pred_fallthru
          _
        // Predicated region
        $region57: #{tpu_custom_call.1} parent=43 // pred_check
          %p300 = pneg %p137
        $region58: #{tpu_custom_call.1} parent=43 // pred_check_branch
          %302 = sbr.rel (%p300) target = $region60
        $region59: #{tpu_custom_call.1} parent=43 // pred_region
          %303 = dma.done [#allocation9], 512
        $region60: #{tpu_custom_call.1} parent=43 // pred_fallthru
          _
        %s304 = sand.u32 %s35, 1
        %s305 = scalar_lea.sflag [#allocation3], %s304
        %s306 = sand.u32 %s35, 1
        %s307 = smul.addr %s306, 8
        %s308 = scalar_lea.vmem [#allocation2], %s307
        %p309 = pneg %p48
        %p310 = pneg %p45
        %s311 = sand.u32 %s27, 1
        %s312 = scalar_lea.sflag [#allocation6], %s311
        %s313 = sand.u32 %s61, 1
        %s314 = smul.addr %s313, 8
        %s315 = scalar_lea.vmem [#allocation5], %s314
        %p316 = pneg %p74
        %p317 = pneg %p71
        %p318 = pneg %p95
        %p319 = pneg %p92
        %p320 = pneg %p116
        %p321 = pneg %p113
        %p322 = pneg %p137
        %p323 = pneg %p134
        %p324 = pneg %p158
        %p325 = pneg %p155
        %p326 = pneg %p184
        %p327 = pneg %p181
        %s328 = sand.u32 %s171, 1
        %s329 = scalar_lea.sflag [#allocation4], %s328
        %s330 = sand.u32 %s171, 1
        %s331 = smul.addr %s330, 8
        %s332 = scalar_lea.vmem [#allocation10], %s331
        %v333 = vld [vmem:[%s282] sm:$0xff]
        %v334 = vld [vmem:[%s291] sm:$0xff]
        %v335 = vld [vmem:[#allocation7] sm:$0xff]
        %v336 = vld [vmem:[#allocation7 + $0x8] sm:$0xff]
        %v337 = vld [vmem:[#allocation7 + $0x10] sm:$0xff]
        %v338 = vld [vmem:[#allocation7 + $0x18] sm:$0xff]
        %v339 = vld [vmem:[%s3] sm:$0x1]
        %v341 = vlaneseq
        %v342 = vshrl.u32 %v341, 7
        %v343 = vsub.s32 0, %v342
        %v344 = vrot.slane %v339, %v343
        %vm346 = vcmask 261120
        %v348 = vsel %vm346, %v333, 0
        %350 = vmatprep.subr.mxu0 0.0
        %351 = vmatpush1.msra.mxu0 %v335
        %352 = vmatprep.subr.mxu0 0.0
        %353 = vmatpush1.msra.mxu0 %v336
        %354 = vmatprep.subr.mxu0 0.0
        %355 = vmatpush1.msra.mxu0 %v337
        %356 = vmatprep.subr.mxu0 0.0
        %357 = vmatpush1.msra.mxu0 %v338
        %358 = vmatprep.subr.mxu0 0.0
        %359 = vmatpush1.msra.mxu0 0.0
        %360 = vmatprep.subr.mxu0 0.0
        %361 = vmatpush1.msra.mxu0 0.0
        %362 = vmatprep.subr.mxu0 0.0
        %363 = vmatpush1.msra.mxu0 0.0
        %364 = vmatprep.subr.mxu0 0.0
        %365 = vmatpush1.msra.mxu0 0.0
        %366 = vmatprep.subr.mxu0 0.0
        %367 = vmatpush1.msra.mxu0 0.0
        %368 = vmatprep.subr.mxu0 0.0
        %369 = vmatpush1.msra.mxu0 0.0
        %370 = vmatprep.subr.mxu0 0.0
        %371 = vmatpush1.msra.mxu0 0.0
        %372 = vmatprep.subr.mxu0 0.0
        %373 = vmatpush1.msra.mxu0 0.0
        %374 = vmatprep.subr.mxu0 0.0
        %375 = vmatpush1.msra.mxu0 0.0
        %376 = vmatprep.subr.mxu0 0.0
        %377 = vmatpush1.msra.mxu0 0.0
        %378 = vmatprep.subr.mxu0 0.0
        %379 = vmatpush1.msra.mxu0 0.0
        %380 = vmatprep.subr.mxu0 0.0
        %381 = vmatpush1.msra.mxu0 0.0
        %382 = vmatprep.subr.mxu0 0.0
        %383 = vmatpush1.msra.mxu0 0.0
        %384 = vmatprep.subr.mxu0 0.0
        %385 = vmatpush1.msra.mxu0 0.0
        %386 = vmatprep.subr.mxu0 0.0
        %387 = vmatpush1.msra.mxu0 0.0
        %388 = vmatprep.subr.mxu0 0.0
        %389 = vmatpush1.msra.mxu0 0.0
        %390 = vmatprep.subr.mxu0 0.0
        %391 = vmatpush1.msra.mxu0 0.0
        %392 = vmatprep.subr.mxu0 0.0
        %393 = vmatpush1.msra.mxu0 0.0
        %394 = vmatprep.subr.mxu0 0.0
        %395 = vmatpush1.msra.mxu0 0.0
        %396 = vmatprep.subr.mxu0 0.0
        %397 = vmatpush1.msra.mxu0 0.0
        %398 = vmatprep.subr.mxu0 0.0
        %399 = vmatpush1.msra.mxu0 0.0
        %400 = vmatprep.subr.mxu0 0.0
        %401 = vmatpush1.msra.mxu0 0.0
        %402 = vmatprep.subr.mxu0 0.0
        %403 = vmatpush1.msra.mxu0 0.0
        %404 = vmatprep.subr.mxu0 0.0
        %405 = vmatpush1.msra.mxu0 0.0
        %406 = vmatprep.subr.mxu0 0.0
        %407 = vmatpush1.msra.mxu0 0.0
        %408 = vmatprep.subr.mxu0 0.0
        %409 = vmatpush1.msra.mxu0 0.0
        %410 = vmatprep.subr.mxu0 0.0
        %411 = vmatpush1.msra.mxu0 0.0
        %412 = vmatprep.subr.mxu0 0.0
        %413 = vmatpush1.msra.mxu0 0.0
        %414 = vmatprep.mubr.f32.mxu0 0.0
        %415 = vmatmul.mubr.f32.gmra.mrb[0].mxu0 %v348
        %v416 = vpop.f32.mrb[0].mxu0
        %v417 = vadd.f32 %v344, %v416
        %v418 = vpop.f32.mrb[0].mxu0
        %419 = vdwg.mxu0
        %v420 = vmul.f32 %v417, 0.35355338
        %v421 = vld [vmem:[#allocation8] sm:$0xff]
        %v422 = vld [vmem:[#allocation8 + $0x8] sm:$0xff]
        %v423 = vld [vmem:[#allocation8 + $0x10] sm:$0xff]
        %v424 = vld [vmem:[#allocation8 + $0x18] sm:$0xff]
        %v425 = vld [vmem:[%s5] sm:$0x1]
        %v427 = vlaneseq
        %v428 = vshrl.u32 %v427, 7
        %v429 = vsub.s32 0, %v428
        %v430 = vrot.slane %v425, %v429
        %v433 = vsel %vm346, %v334, 0
        %435 = vmatprep.subr.mxu0 0.0
        %436 = vmatpush1.msra.mxu0 %v421
        %437 = vmatprep.subr.mxu0 0.0
        %438 = vmatpush1.msra.mxu0 %v422
        %439 = vmatprep.subr.mxu0 0.0
        %440 = vmatpush1.msra.mxu0 %v423
        %441 = vmatprep.subr.mxu0 0.0
        %442 = vmatpush1.msra.mxu0 %v424
        %443 = vmatprep.subr.mxu0 0.0
        %444 = vmatpush1.msra.mxu0 0.0
        %445 = vmatprep.subr.mxu0 0.0
        %446 = vmatpush1.msra.mxu0 0.0
        %447 = vmatprep.subr.mxu0 0.0
        %448 = vmatpush1.msra.mxu0 0.0
        %449 = vmatprep.subr.mxu0 0.0
        %450 = vmatpush1.msra.mxu0 0.0
        %451 = vmatprep.subr.mxu0 0.0
        %452 = vmatpush1.msra.mxu0 0.0
        %453 = vmatprep.subr.mxu0 0.0
        %454 = vmatpush1.msra.mxu0 0.0
        %455 = vmatprep.subr.mxu0 0.0
        %456 = vmatpush1.msra.mxu0 0.0
        %457 = vmatprep.subr.mxu0 0.0
        %458 = vmatpush1.msra.mxu0 0.0
        %459 = vmatprep.subr.mxu0 0.0
        %460 = vmatpush1.msra.mxu0 0.0
        %461 = vmatprep.subr.mxu0 0.0
        %462 = vmatpush1.msra.mxu0 0.0
        %463 = vmatprep.subr.mxu0 0.0
        %464 = vmatpush1.msra.mxu0 0.0
        %465 = vmatprep.subr.mxu0 0.0
        %466 = vmatpush1.msra.mxu0 0.0
        %467 = vmatprep.subr.mxu0 0.0
        %468 = vmatpush1.msra.mxu0 0.0
        %469 = vmatprep.subr.mxu0 0.0
        %470 = vmatpush1.msra.mxu0 0.0
        %471 = vmatprep.subr.mxu0 0.0
        %472 = vmatpush1.msra.mxu0 0.0
        %473 = vmatprep.subr.mxu0 0.0
        %474 = vmatpush1.msra.mxu0 0.0
        %475 = vmatprep.subr.mxu0 0.0
        %476 = vmatpush1.msra.mxu0 0.0
        %477 = vmatprep.subr.mxu0 0.0
        %478 = vmatpush1.msra.mxu0 0.0
        %479 = vmatprep.subr.mxu0 0.0
        %480 = vmatpush1.msra.mxu0 0.0
        %481 = vmatprep.subr.mxu0 0.0
        %482 = vmatpush1.msra.mxu0 0.0
        %483 = vmatprep.subr.mxu0 0.0
        %484 = vmatpush1.msra.mxu0 0.0
        %485 = vmatprep.subr.mxu0 0.0
        %486 = vmatpush1.msra.mxu0 0.0
        %487 = vmatprep.subr.mxu0 0.0
        %488 = vmatpush1.msra.mxu0 0.0
        %489 = vmatprep.subr.mxu0 0.0
        %490 = vmatpush1.msra.mxu0 0.0
        %491 = vmatprep.subr.mxu0 0.0
        %492 = vmatpush1.msra.mxu0 0.0
        %493 = vmatprep.subr.mxu0 0.0
        %494 = vmatpush1.msra.mxu0 0.0
        %495 = vmatprep.subr.mxu0 0.0
        %496 = vmatpush1.msra.mxu0 0.0
        %497 = vmatprep.subr.mxu0 0.0
        %498 = vmatpush1.msra.mxu0 0.0
        %499 = vmatprep.mubr.f32.mxu0 0.0
        %500 = vmatmul.mubr.f32.gmra.mrb[0].mxu0 %v433
        %v501 = vpop.f32.mrb[0].mxu0
        %v502 = vadd.f32 %v430, %v501
        %v503 = vpop.f32.mrb[0].mxu0
        %504 = vdwg.mxu0
        %vm505 = vcmask 64512
        %v507 = vsel %vm505, %v420, 0
        %v510 = vsel %vm505, %v502, 0
        %512 = vmatprep.subr.mxu0 0.0
        %513 = vmatpush1.xpose.msra.mxu0 %v510
        %514 = vmatprep.subr.mxu0 0.0
        %515 = vmatpush1.xpose.msra.mxu0 0.0
        %516 = vmatprep.subr.mxu0 0.0
        %517 = vmatpush1.xpose.msra.mxu0 0.0
        %518 = vmatprep.subr.mxu0 0.0
        %519 = vmatpush1.xpose.msra.mxu0 0.0
        %520 = vmatprep.subr.mxu0 0.0
        %521 = vmatpush1.xpose.msra.mxu0 0.0
        %522 = vmatprep.subr.mxu0 0.0
        %523 = vmatpush1.xpose.msra.mxu0 0.0
        %524 = vmatprep.subr.mxu0 0.0
        %525 = vmatpush1.xpose.msra.mxu0 0.0
        %526 = vmatprep.subr.mxu0 0.0
        %527 = vmatpush1.xpose.msra.mxu0 0.0
        %528 = vmatprep.subr.mxu0 0.0
        %529 = vmatpush1.xpose.msra.mxu0 0.0
        %530 = vmatprep.subr.mxu0 0.0
        %531 = vmatpush1.xpose.msra.mxu0 0.0
        %532 = vmatprep.subr.mxu0 0.0
        %533 = vmatpush1.xpose.msra.mxu0 0.0
        %534 = vmatprep.subr.mxu0 0.0
        %535 = vmatpush1.xpose.msra.mxu0 0.0
        %536 = vmatprep.subr.mxu0 0.0
        %537 = vmatpush1.xpose.msra.mxu0 0.0
        %538 = vmatprep.subr.mxu0 0.0
        %539 = vmatpush1.xpose.msra.mxu0 0.0
        %540 = vmatprep.subr.mxu0 0.0
        %541 = vmatpush1.xpose.msra.mxu0 0.0
        %542 = vmatprep.subr.mxu0 0.0
        %543 = vmatpush1.xpose.msra.mxu0 0.0
        %544 = vmatprep.subr.mxu0 0.0
        %545 = vmatpush1.xpose.msra.mxu0 0.0
        %546 = vmatprep.subr.mxu0 0.0
        %547 = vmatpush1.xpose.msra.mxu0 0.0
        %548 = vmatprep.subr.mxu0 0.0
        %549 = vmatpush1.xpose.msra.mxu0 0.0
        %550 = vmatprep.subr.mxu0 0.0
        %551 = vmatpush1.xpose.msra.mxu0 0.0
        %552 = vmatprep.subr.mxu0 0.0
        %553 = vmatpush1.xpose.msra.mxu0 0.0
        %554 = vmatprep.subr.mxu0 0.0
        %555 = vmatpush1.xpose.msra.mxu0 0.0
        %556 = vmatprep.subr.mxu0 0.0
        %557 = vmatpush1.xpose.msra.mxu0 0.0
        %558 = vmatprep.subr.mxu0 0.0
        %559 = vmatpush1.xpose.msra.mxu0 0.0
        %560 = vmatprep.subr.mxu0 0.0
        %561 = vmatpush1.xpose.msra.mxu0 0.0
        %562 = vmatprep.subr.mxu0 0.0
        %563 = vmatpush1.xpose.msra.mxu0 0.0
        %564 = vmatprep.subr.mxu0 0.0
        %565 = vmatpush1.xpose.msra.mxu0 0.0
        %566 = vmatprep.subr.mxu0 0.0
        %567 = vmatpush1.xpose.msra.mxu0 0.0
        %568 = vmatprep.subr.mxu0 0.0
        %569 = vmatpush1.xpose.msra.mxu0 0.0
        %570 = vmatprep.subr.mxu0 0.0
        %571 = vmatpush1.xpose.msra.mxu0 0.0
        %572 = vmatprep.subr.mxu0 0.0
        %573 = vmatpush1.xpose.msra.mxu0 0.0
        %574 = vmatprep.subr.mxu0 0.0
        %575 = vmatpush1.xpose.msra.mxu0 0.0
        %576 = vmatprep.mubr.f32.mxu0 0.0
        %577 = vmatmul.mubr.f32.gmra.mrb[0].mxu0 %v507
        %v578 = vpop.f32.mrb[0].mxu0
        %v579 = vadd.f32 0.0, %v578
        %v580 = vpop.f32.mrb[0].mxu0
        %581 = vdwg.mxu0
        %v582 = vsel %vm505, %v579, -inf
        %583 = vmax.xlane.f32.xlu0 %v582
        %v584 = vpop.xlane.xlu0 %583
        %v585 = vsub.f32 %v579, %v584
        %v586 = vmul.f32 %v585, 1.442695
        %v587 = vpow.pop %v586
        %v588 = vsel %vm505, %v587, 0.0
        %589 = vadd.xlane.f32.xlu0 %v588
        %v590 = vpop.xlane.xlu0 %589
        %v591 = vrcp.pop %v590
        %v592 = vmul.f32 %v587, %v591
        %593 = vrot.lane.b32.xlu0 %v502, 96
        %v594 = vpop.permute.xlu0 %593
        %v597 = vsel %vm505, %v592, 0
        %599 = vmatprep.subr.mxu0 0.0
        %600 = vmatpush1.msra.mxu0 %v594
        %601 = vmatprep.subr.mxu0 0.0
        %602 = vmatpush1.msra.mxu0 0.0
        %603 = vmatprep.subr.mxu0 0.0
        %604 = vmatpush1.msra.mxu0 0.0
        %605 = vmatprep.subr.mxu0 0.0
        %606 = vmatpush1.msra.mxu0 0.0
        %607 = vmatprep.subr.mxu0 0.0
        %608 = vmatpush1.msra.mxu0 0.0
        %609 = vmatprep.subr.mxu0 0.0
        %610 = vmatpush1.msra.mxu0 0.0
        %611 = vmatprep.subr.mxu0 0.0
        %612 = vmatpush1.msra.mxu0 0.0
        %613 = vmatprep.subr.mxu0 0.0
        %614 = vmatpush1.msra.mxu0 0.0
        %615 = vmatprep.subr.mxu0 0.0
        %616 = vmatpush1.msra.mxu0 0.0
        %617 = vmatprep.subr.mxu0 0.0
        %618 = vmatpush1.msra.mxu0 0.0
        %619 = vmatprep.subr.mxu0 0.0
        %620 = vmatpush1.msra.mxu0 0.0
        %621 = vmatprep.subr.mxu0 0.0
        %622 = vmatpush1.msra.mxu0 0.0
        %623 = vmatprep.subr.mxu0 0.0
        %624 = vmatpush1.msra.mxu0 0.0
        %625 = vmatprep.subr.mxu0 0.0
        %626 = vmatpush1.msra.mxu0 0.0
        %627 = vmatprep.subr.mxu0 0.0
        %628 = vmatpush1.msra.mxu0 0.0
        %629 = vmatprep.subr.mxu0 0.0
        %630 = vmatpush1.msra.mxu0 0.0
        %631 = vmatprep.subr.mxu0 0.0
        %632 = vmatpush1.msra.mxu0 0.0
        %633 = vmatprep.subr.mxu0 0.0
        %634 = vmatpush1.msra.mxu0 0.0
        %635 = vmatprep.subr.mxu0 0.0
        %636 = vmatpush1.msra.mxu0 0.0
        %637 = vmatprep.subr.mxu0 0.0
        %638 = vmatpush1.msra.mxu0 0.0
        %639 = vmatprep.subr.mxu0 0.0
        %640 = vmatpush1.msra.mxu0 0.0
        %641 = vmatprep.subr.mxu0 0.0
        %642 = vmatpush1.msra.mxu0 0.0
        %643 = vmatprep.subr.mxu0 0.0
        %644 = vmatpush1.msra.mxu0 0.0
        %645 = vmatprep.subr.mxu0 0.0
        %646 = vmatpush1.msra.mxu0 0.0
        %647 = vmatprep.subr.mxu0 0.0
        %648 = vmatpush1.msra.mxu0 0.0
        %649 = vmatprep.subr.mxu0 0.0
        %650 = vmatpush1.msra.mxu0 0.0
        %651 = vmatprep.subr.mxu0 0.0
        %652 = vmatpush1.msra.mxu0 0.0
        %653 = vmatprep.subr.mxu0 0.0
        %654 = vmatpush1.msra.mxu0 0.0
        %655 = vmatprep.subr.mxu0 0.0
        %656 = vmatpush1.msra.mxu0 0.0
        %657 = vmatprep.subr.mxu0 0.0
        %658 = vmatpush1.msra.mxu0 0.0
        %659 = vmatprep.subr.mxu0 0.0
        %660 = vmatpush1.msra.mxu0 0.0
        %661 = vmatprep.subr.mxu0 0.0
        %662 = vmatpush1.msra.mxu0 0.0
        %663 = vmatprep.mubr.f32.mxu0 0.0
        %664 = vmatmul.mubr.f32.gmra.mrb[0].mxu0 %v597
        %v665 = vpop.f32.mrb[0].mxu0
        %v666 = vadd.f32 0.0, %v665
        %v667 = vpop.f32.mrb[0].mxu0
        %668 = vdwg.mxu0
        %669 = vrot.lane.b32.xlu0 %v420, 120
        %v670 = vpop.permute.xlu0 %669
        %671 = vrot.lane.b32.xlu0 %v502, 120
        %v672 = vpop.permute.xlu0 %671
        %v673 = vsel %vm505, %v670, 0
        %v675 = vsel %vm505, %v672, 0
        %677 = vmatprep.subr.mxu0 0.0
        %678 = vmatpush1.xpose.msra.mxu0 %v675
        %679 = vmatprep.subr.mxu0 0.0
        %680 = vmatpush1.xpose.msra.mxu0 0.0
        %681 = vmatprep.subr.mxu0 0.0
        %682 = vmatpush1.xpose.msra.mxu0 0.0
        %683 = vmatprep.subr.mxu0 0.0
        %684 = vmatpush1.xpose.msra.mxu0 0.0
        %685 = vmatprep.subr.mxu0 0.0
        %686 = vmatpush1.xpose.msra.mxu0 0.0
        %687 = vmatprep.subr.mxu0 0.0
        %688 = vmatpush1.xpose.msra.mxu0 0.0
        %689 = vmatprep.subr.mxu0 0.0
        %690 = vmatpush1.xpose.msra.mxu0 0.0
        %691 = vmatprep.subr.mxu0 0.0
        %692 = vmatpush1.xpose.msra.mxu0 0.0
        %693 = vmatprep.subr.mxu0 0.0
        %694 = vmatpush1.xpose.msra.mxu0 0.0
        %695 = vmatprep.subr.mxu0 0.0
        %696 = vmatpush1.xpose.msra.mxu0 0.0
        %697 = vmatprep.subr.mxu0 0.0
        %698 = vmatpush1.xpose.msra.mxu0 0.0
        %699 = vmatprep.subr.mxu0 0.0
        %700 = vmatpush1.xpose.msra.mxu0 0.0
        %701 = vmatprep.subr.mxu0 0.0
        %702 = vmatpush1.xpose.msra.mxu0 0.0
        %703 = vmatprep.subr.mxu0 0.0
        %704 = vmatpush1.xpose.msra.mxu0 0.0
        %705 = vmatprep.subr.mxu0 0.0
        %706 = vmatpush1.xpose.msra.mxu0 0.0
        %707 = vmatprep.subr.mxu0 0.0
        %708 = vmatpush1.xpose.msra.mxu0 0.0
        %709 = vmatprep.subr.mxu0 0.0
        %710 = vmatpush1.xpose.msra.mxu0 0.0
        %711 = vmatprep.subr.mxu0 0.0
        %712 = vmatpush1.xpose.msra.mxu0 0.0
        %713 = vmatprep.subr.mxu0 0.0
        %714 = vmatpush1.xpose.msra.mxu0 0.0
        %715 = vmatprep.subr.mxu0 0.0
        %716 = vmatpush1.xpose.msra.mxu0 0.0
        %717 = vmatprep.subr.mxu0 0.0
        %718 = vmatpush1.xpose.msra.mxu0 0.0
        %719 = vmatprep.subr.mxu0 0.0
        %720 = vmatpush1.xpose.msra.mxu0 0.0
        %721 = vmatprep.subr.mxu0 0.0
        %722 = vmatpush1.xpose.msra.mxu0 0.0
        %723 = vmatprep.subr.mxu0 0.0
        %724 = vmatpush1.xpose.msra.mxu0 0.0
        %725 = vmatprep.subr.mxu0 0.0
        %726 = vmatpush1.xpose.msra.mxu0 0.0
        %727 = vmatprep.subr.mxu0 0.0
        %728 = vmatpush1.xpose.msra.mxu0 0.0
        %729 = vmatprep.subr.mxu0 0.0
        %730 = vmatpush1.xpose.msra.mxu0 0.0
        %731 = vmatprep.subr.mxu0 0.0
        %732 = vmatpush1.xpose.msra.mxu0 0.0
        %733 = vmatprep.subr.mxu0 0.0
        %734 = vmatpush1.xpose.msra.mxu0 0.0
        %735 = vmatprep.subr.mxu0 0.0
        %736 = vmatpush1.xpose.msra.mxu0 0.0
        %737 = vmatprep.subr.mxu0 0.0
        %738 = vmatpush1.xpose.msra.mxu0 0.0
        %739 = vmatprep.subr.mxu0 0.0
        %740 = vmatpush1.xpose.msra.mxu0 0.0
        %741 = vmatprep.mubr.f32.mxu0 0.0
        %742 = vmatmul.mubr.f32.gmra.mrb[0].mxu0 %v673
        %v743 = vpop.f32.mrb[0].mxu0
        %v744 = vadd.f32 0.0, %v743
        %v745 = vpop.f32.mrb[0].mxu0
        %746 = vdwg.mxu0
        %v747 = vsel %vm505, %v744, -inf
        %748 = vmax.xlane.f32.xlu0 %v747
        %v749 = vpop.xlane.xlu0 %748
        %v750 = vsub.f32 %v744, %v749
        %v751 = vmul.f32 %v750, 1.442695
        %v752 = vpow.pop %v751
        %v753 = vsel %vm505, %v752, 0.0
        %754 = vadd.xlane.f32.xlu0 %v753
        %v755 = vpop.xlane.xlu0 %754
        %v756 = vrcp.pop %v755
        %v757 = vmul.f32 %v752, %v756
        %758 = vrot.lane.b32.xlu0 %v502, 88
        %v759 = vpop.permute.xlu0 %758
        %v762 = vsel %vm505, %v757, 0
        %764 = vmatprep.subr.mxu0 0.0
        %765 = vmatpush1.msra.mxu0 %v759
        %766 = vmatprep.subr.mxu0 0.0
        %767 = vmatpush1.msra.mxu0 0.0
        %768 = vmatprep.subr.mxu0 0.0
        %769 = vmatpush1.msra.mxu0 0.0
        %770 = vmatprep.subr.mxu0 0.0
        %771 = vmatpush1.msra.mxu0 0.0
        %772 = vmatprep.subr.mxu0 0.0
        %773 = vmatpush1.msra.mxu0 0.0
        %774 = vmatprep.subr.mxu0 0.0
        %775 = vmatpush1.msra.mxu0 0.0
        %776 = vmatprep.subr.mxu0 0.0
        %777 = vmatpush1.msra.mxu0 0.0
        %778 = vmatprep.subr.mxu0 0.0
        %779 = vmatpush1.msra.mxu0 0.0
        %780 = vmatprep.subr.mxu0 0.0
        %781 = vmatpush1.msra.mxu0 0.0
        %782 = vmatprep.subr.mxu0 0.0
        %783 = vmatpush1.msra.mxu0 0.0
        %784 = vmatprep.subr.mxu0 0.0
        %785 = vmatpush1.msra.mxu0 0.0
        %786 = vmatprep.subr.mxu0 0.0
        %787 = vmatpush1.msra.mxu0 0.0
        %788 = vmatprep.subr.mxu0 0.0
        %789 = vmatpush1.msra.mxu0 0.0
        %790 = vmatprep.subr.mxu0 0.0
        %791 = vmatpush1.msra.mxu0 0.0
        %792 = vmatprep.subr.mxu0 0.0
        %793 = vmatpush1.msra.mxu0 0.0
        %794 = vmatprep.subr.mxu0 0.0
        %795 = vmatpush1.msra.mxu0 0.0
        %796 = vmatprep.subr.mxu0 0.0
        %797 = vmatpush1.msra.mxu0 0.0
        %798 = vmatprep.subr.mxu0 0.0
        %799 = vmatpush1.msra.mxu0 0.0
        %800 = vmatprep.subr.mxu0 0.0
        %801 = vmatpush1.msra.mxu0 0.0
        %802 = vmatprep.subr.mxu0 0.0
        %803 = vmatpush1.msra.mxu0 0.0
        %804 = vmatprep.subr.mxu0 0.0
        %805 = vmatpush1.msra.mxu0 0.0
        %806 = vmatprep.subr.mxu0 0.0
        %807 = vmatpush1.msra.mxu0 0.0
        %808 = vmatprep.subr.mxu0 0.0
        %809 = vmatpush1.msra.mxu0 0.0
        %810 = vmatprep.subr.mxu0 0.0
        %811 = vmatpush1.msra.mxu0 0.0
        %812 = vmatprep.subr.mxu0 0.0
        %813 = vmatpush1.msra.mxu0 0.0
        %814 = vmatprep.subr.mxu0 0.0
        %815 = vmatpush1.msra.mxu0 0.0
        %816 = vmatprep.subr.mxu0 0.0
        %817 = vmatpush1.msra.mxu0 0.0
        %818 = vmatprep.subr.mxu0 0.0
        %819 = vmatpush1.msra.mxu0 0.0
        %820 = vmatprep.subr.mxu0 0.0
        %821 = vmatpush1.msra.mxu0 0.0
        %822 = vmatprep.subr.mxu0 0.0
        %823 = vmatpush1.msra.mxu0 0.0
        %824 = vmatprep.subr.mxu0 0.0
        %825 = vmatpush1.msra.mxu0 0.0
        %826 = vmatprep.subr.mxu0 0.0
        %827 = vmatpush1.msra.mxu0 0.0
        %828 = vmatprep.mubr.f32.mxu0 0.0
        %829 = vmatmul.mubr.f32.gmra.mrb[0].mxu0 %v762
        %v830 = vpop.f32.mrb[0].mxu0
        %v831 = vadd.f32 0.0, %v830
        %v832 = vpop.f32.mrb[0].mxu0
        %833 = vdwg.mxu0
        %834 = vrot.lane.b32.xlu0 %v420, 112
        %v835 = vpop.permute.xlu0 %834
        %836 = vrot.lane.b32.xlu0 %v502, 112
        %v837 = vpop.permute.xlu0 %836
        %v838 = vsel %vm505, %v835, 0
        %v840 = vsel %vm505, %v837, 0
        %842 = vmatprep.subr.mxu0 0.0
        %843 = vmatpush1.xpose.msra.mxu0 %v840
        %844 = vmatprep.subr.mxu0 0.0
        %845 = vmatpush1.xpose.msra.mxu0 0.0
        %846 = vmatprep.subr.mxu0 0.0
        %847 = vmatpush1.xpose.msra.mxu0 0.0
        %848 = vmatprep.subr.mxu0 0.0
        %849 = vmatpush1.xpose.msra.mxu0 0.0
        %850 = vmatprep.subr.mxu0 0.0
        %851 = vmatpush1.xpose.msra.mxu0 0.0
        %852 = vmatprep.subr.mxu0 0.0
        %853 = vmatpush1.xpose.msra.mxu0 0.0
        %854 = vmatprep.subr.mxu0 0.0
        %855 = vmatpush1.xpose.msra.mxu0 0.0
        %856 = vmatprep.subr.mxu0 0.0
        %857 = vmatpush1.xpose.msra.mxu0 0.0
        %858 = vmatprep.subr.mxu0 0.0
        %859 = vmatpush1.xpose.msra.mxu0 0.0
        %860 = vmatprep.subr.mxu0 0.0
        %861 = vmatpush1.xpose.msra.mxu0 0.0
        %862 = vmatprep.subr.mxu0 0.0
        %863 = vmatpush1.xpose.msra.mxu0 0.0
        %864 = vmatprep.subr.mxu0 0.0
        %865 = vmatpush1.xpose.msra.mxu0 0.0
        %866 = vmatprep.subr.mxu0 0.0
        %867 = vmatpush1.xpose.msra.mxu0 0.0
        %868 = vmatprep.subr.mxu0 0.0
        %869 = vmatpush1.xpose.msra.mxu0 0.0
        %870 = vmatprep.subr.mxu0 0.0
        %871 = vmatpush1.xpose.msra.mxu0 0.0
        %872 = vmatprep.subr.mxu0 0.0
        %873 = vmatpush1.xpose.msra.mxu0 0.0
        %874 = vmatprep.subr.mxu0 0.0
        %875 = vmatpush1.xpose.msra.mxu0 0.0
        %876 = vmatprep.subr.mxu0 0.0
        %877 = vmatpush1.xpose.msra.mxu0 0.0
        %878 = vmatprep.subr.mxu0 0.0
        %879 = vmatpush1.xpose.msra.mxu0 0.0
        %880 = vmatprep.subr.mxu0 0.0
        %881 = vmatpush1.xpose.msra.mxu0 0.0
        %882 = vmatprep.subr.mxu0 0.0
        %883 = vmatpush1.xpose.msra.mxu0 0.0
        %884 = vmatprep.subr.mxu0 0.0
        %885 = vmatpush1.xpose.msra.mxu0 0.0
        %886 = vmatprep.subr.mxu0 0.0
        %887 = vmatpush1.xpose.msra.mxu0 0.0
        %888 = vmatprep.subr.mxu0 0.0
        %889 = vmatpush1.xpose.msra.mxu0 0.0
        %890 = vmatprep.subr.mxu0 0.0
        %891 = vmatpush1.xpose.msra.mxu0 0.0
        %892 = vmatprep.subr.mxu0 0.0
        %893 = vmatpush1.xpose.msra.mxu0 0.0
        %894 = vmatprep.subr.mxu0 0.0
        %895 = vmatpush1.xpose.msra.mxu0 0.0
        %896 = vmatprep.subr.mxu0 0.0
        %897 = vmatpush1.xpose.msra.mxu0 0.0
        %898 = vmatprep.subr.mxu0 0.0
        %899 = vmatpush1.xpose.msra.mxu0 0.0
        %900 = vmatprep.subr.mxu0 0.0
        %901 = vmatpush1.xpose.msra.mxu0 0.0
        %902 = vmatprep.subr.mxu0 0.0
        %903 = vmatpush1.xpose.msra.mxu0 0.0
        %904 = vmatprep.subr.mxu0 0.0
        %905 = vmatpush1.xpose.msra.mxu0 0.0
        %906 = vmatprep.mubr.f32.mxu0 0.0
        %907 = vmatmul.mubr.f32.gmra.mrb[0].mxu0 %v838
        %v908 = vpop.f32.mrb[0].mxu0
        %v909 = vadd.f32 0.0, %v908
        %v910 = vpop.f32.mrb[0].mxu0
        %911 = vdwg.mxu0
        %v912 = vsel %vm505, %v909, -inf
        %913 = vmax.xlane.f32.xlu0 %v912
        %v914 = vpop.xlane.xlu0 %913
        %v915 = vsub.f32 %v909, %v914
        %v916 = vmul.f32 %v915, 1.442695
        %v917 = vpow.pop %v916
        %v918 = vsel %vm505, %v917, 0.0
        %919 = vadd.xlane.f32.xlu0 %v918
        %v920 = vpop.xlane.xlu0 %919
        %v921 = vrcp.pop %v920
        %v922 = vmul.f32 %v917, %v921
        %923 = vrot.lane.b32.xlu0 %v502, 80
        %v924 = vpop.permute.xlu0 %923
        %v927 = vsel %vm505, %v922, 0
        %929 = vmatprep.subr.mxu0 0.0
        %930 = vmatpush1.msra.mxu0 %v924
        %931 = vmatprep.subr.mxu0 0.0
        %932 = vmatpush1.msra.mxu0 0.0
        %933 = vmatprep.subr.mxu0 0.0
        %934 = vmatpush1.msra.mxu0 0.0
        %935 = vmatprep.subr.mxu0 0.0
        %936 = vmatpush1.msra.mxu0 0.0
        %937 = vmatprep.subr.mxu0 0.0
        %938 = vmatpush1.msra.mxu0 0.0
        %939 = vmatprep.subr.mxu0 0.0
        %940 = vmatpush1.msra.mxu0 0.0
        %941 = vmatprep.subr.mxu0 0.0
        %942 = vmatpush1.msra.mxu0 0.0
        %943 = vmatprep.subr.mxu0 0.0
        %944 = vmatpush1.msra.mxu0 0.0
        %945 = vmatprep.subr.mxu0 0.0
        %946 = vmatpush1.msra.mxu0 0.0
        %947 = vmatprep.subr.mxu0 0.0
        %948 = vmatpush1.msra.mxu0 0.0
        %949 = vmatprep.subr.mxu0 0.0
        %950 = vmatpush1.msra.mxu0 0.0
        %951 = vmatprep.subr.mxu0 0.0
        %952 = vmatpush1.msra.mxu0 0.0
        %953 = vmatprep.subr.mxu0 0.0
        %954 = vmatpush1.msra.mxu0 0.0
        %955 = vmatprep.subr.mxu0 0.0
        %956 = vmatpush1.msra.mxu0 0.0
        %957 = vmatprep.subr.mxu0 0.0
        %958 = vmatpush1.msra.mxu0 0.0
        %959 = vmatprep.subr.mxu0 0.0
        %960 = vmatpush1.msra.mxu0 0.0
        %961 = vmatprep.subr.mxu0 0.0
        %962 = vmatpush1.msra.mxu0 0.0
        %963 = vmatprep.subr.mxu0 0.0
        %964 = vmatpush1.msra.mxu0 0.0
        %965 = vmatprep.subr.mxu0 0.0
        %966 = vmatpush1.msra.mxu0 0.0
        %967 = vmatprep.subr.mxu0 0.0
        %968 = vmatpush1.msra.mxu0 0.0
        %969 = vmatprep.subr.mxu0 0.0
        %970 = vmatpush1.msra.mxu0 0.0
        %971 = vmatprep.subr.mxu0 0.0
        %972 = vmatpush1.msra.mxu0 0.0
        %973 = vmatprep.subr.mxu0 0.0
        %974 = vmatpush1.msra.mxu0 0.0
        %975 = vmatprep.subr.mxu0 0.0
        %976 = vmatpush1.msra.mxu0 0.0
        %977 = vmatprep.subr.mxu0 0.0
        %978 = vmatpush1.msra.mxu0 0.0
        %979 = vmatprep.subr.mxu0 0.0
        %980 = vmatpush1.msra.mxu0 0.0
        %981 = vmatprep.subr.mxu0 0.0
        %982 = vmatpush1.msra.mxu0 0.0
        %983 = vmatprep.subr.mxu0 0.0
        %984 = vmatpush1.msra.mxu0 0.0
        %985 = vmatprep.subr.mxu0 0.0
        %986 = vmatpush1.msra.mxu0 0.0
        %987 = vmatprep.subr.mxu0 0.0
        %988 = vmatpush1.msra.mxu0 0.0
        %989 = vmatprep.subr.mxu0 0.0
        %990 = vmatpush1.msra.mxu0 0.0
        %991 = vmatprep.subr.mxu0 0.0
        %992 = vmatpush1.msra.mxu0 0.0
        %993 = vmatprep.mubr.f32.mxu0 0.0
        %994 = vmatmul.mubr.f32.gmra.mrb[0].mxu0 %v927
        %v995 = vpop.f32.mrb[0].mxu0
        %v996 = vadd.f32 0.0, %v995
        %v997 = vpop.f32.mrb[0].mxu0
        %998 = vdwg.mxu0
        %999 = vrot.lane.b32.xlu0 %v420, 104
        %v1000 = vpop.permute.xlu0 %999
        %1001 = vrot.lane.b32.xlu0 %v502, 104
        %v1002 = vpop.permute.xlu0 %1001
        %v1003 = vsel %vm505, %v1000, 0
        %v1005 = vsel %vm505, %v1002, 0
        %1007 = vmatprep.subr.mxu0 0.0
        %1008 = vmatpush1.xpose.msra.mxu0 %v1005
        %1009 = vmatprep.subr.mxu0 0.0
        %1010 = vmatpush1.xpose.msra.mxu0 0.0
        %1011 = vmatprep.subr.mxu0 0.0
        %1012 = vmatpush1.xpose.msra.mxu0 0.0
        %1013 = vmatprep.subr.mxu0 0.0
        %1014 = vmatpush1.xpose.msra.mxu0 0.0
        %1015 = vmatprep.subr.mxu0 0.0
        %1016 = vmatpush1.xpose.msra.mxu0 0.0
        %1017 = vmatprep.subr.mxu0 0.0
        %1018 = vmatpush1.xpose.msra.mxu0 0.0
        %1019 = vmatprep.subr.mxu0 0.0
        %1020 = vmatpush1.xpose.msra.mxu0 0.0
        %1021 = vmatprep.subr.mxu0 0.0
        %1022 = vmatpush1.xpose.msra.mxu0 0.0
        %1023 = vmatprep.subr.mxu0 0.0
        %1024 = vmatpush1.xpose.msra.mxu0 0.0
        %1025 = vmatprep.subr.mxu0 0.0
        %1026 = vmatpush1.xpose.msra.mxu0 0.0
        %1027 = vmatprep.subr.mxu0 0.0
        %1028 = vmatpush1.xpose.msra.mxu0 0.0
        %1029 = vmatprep.subr.mxu0 0.0
        %1030 = vmatpush1.xpose.msra.mxu0 0.0
        %1031 = vmatprep.subr.mxu0 0.0
        %1032 = vmatpush1.xpose.msra.mxu0 0.0
        %1033 = vmatprep.subr.mxu0 0.0
        %1034 = vmatpush1.xpose.msra.mxu0 0.0
        %1035 = vmatprep.subr.mxu0 0.0
        %1036 = vmatpush1.xpose.msra.mxu0 0.0
        %1037 = vmatprep.subr.mxu0 0.0
        %1038 = vmatpush1.xpose.msra.mxu0 0.0
        %1039 = vmatprep.subr.mxu0 0.0
        %1040 = vmatpush1.xpose.msra.mxu0 0.0
        %1041 = vmatprep.subr.mxu0 0.0
        %1042 = vmatpush1.xpose.msra.mxu0 0.0
        %1043 = vmatprep.subr.mxu0 0.0
        %1044 = vmatpush1.xpose.msra.mxu0 0.0
        %1045 = vmatprep.subr.mxu0 0.0
        %1046 = vmatpush1.xpose.msra.mxu0 0.0
        %1047 = vmatprep.subr.mxu0 0.0
        %1048 = vmatpush1.xpose.msra.mxu0 0.0
        %1049 = vmatprep.subr.mxu0 0.0
        %1050 = vmatpush1.xpose.msra.mxu0 0.0
        %1051 = vmatprep.subr.mxu0 0.0
        %1052 = vmatpush1.xpose.msra.mxu0 0.0
        %1053 = vmatprep.subr.mxu0 0.0
        %1054 = vmatpush1.xpose.msra.mxu0 0.0
        %1055 = vmatprep.subr.mxu0 0.0
        %1056 = vmatpush1.xpose.msra.mxu0 0.0
        %1057 = vmatprep.subr.mxu0 0.0
        %1058 = vmatpush1.xpose.msra.mxu0 0.0
        %1059 = vmatprep.subr.mxu0 0.0
        %1060 = vmatpush1.xpose.msra.mxu0 0.0
        %1061 = vmatprep.subr.mxu0 0.0
        %1062 = vmatpush1.xpose.msra.mxu0 0.0
        %1063 = vmatprep.subr.mxu0 0.0
        %1064 = vmatpush1.xpose.msra.mxu0 0.0
        %1065 = vmatprep.subr.mxu0 0.0
        %1066 = vmatpush1.xpose.msra.mxu0 0.0
        %1067 = vmatprep.subr.mxu0 0.0
        %1068 = vmatpush1.xpose.msra.mxu0 0.0
        %1069 = vmatprep.subr.mxu0 0.0
        %1070 = vmatpush1.xpose.msra.mxu0 0.0
        %1071 = vmatprep.mubr.f32.mxu0 0.0
        %1072 = vmatmul.mubr.f32.gmra.mrb[0].mxu0 %v1003
        %v1073 = vpop.f32.mrb[0].mxu0
        %v1074 = vadd.f32 0.0, %v1073
        %v1075 = vpop.f32.mrb[0].mxu0
        %1076 = vdwg.mxu0
        %v1077 = vsel %vm505, %v1074, -inf
        %1078 = vmax.xlane.f32.xlu0 %v1077
        %v1079 = vpop.xlane.xlu0 %1078
        %v1080 = vsub.f32 %v1074, %v1079
        %v1081 = vmul.f32 %v1080, 1.442695
        %v1082 = vpow.pop %v1081
        %v1083 = vsel %vm505, %v1082, 0.0
        %1084 = vadd.xlane.f32.xlu0 %v1083
        %v1085 = vpop.xlane.xlu0 %1084
        %v1086 = vrcp.pop %v1085
        %v1087 = vmul.f32 %v1082, %v1086
        %1088 = vrot.lane.b32.xlu0 %v502, 72
        %v1089 = vpop.permute.xlu0 %1088
        %v1092 = vsel %vm505, %v1087, 0
        %1094 = vmatprep.subr.mxu0 0.0
        %1095 = vmatpush1.msra.mxu0 %v1089
        %1096 = vmatprep.subr.mxu0 0.0
        %1097 = vmatpush1.msra.mxu0 0.0
        %1098 = vmatprep.subr.mxu0 0.0
        %1099 = vmatpush1.msra.mxu0 0.0
        %1100 = vmatprep.subr.mxu0 0.0
        %1101 = vmatpush1.msra.mxu0 0.0
        %1102 = vmatprep.subr.mxu0 0.0
        %1103 = vmatpush1.msra.mxu0 0.0
        %1104 = vmatprep.subr.mxu0 0.0
        %1105 = vmatpush1.msra.mxu0 0.0
        %1106 = vmatprep.subr.mxu0 0.0
        %1107 = vmatpush1.msra.mxu0 0.0
        %1108 = vmatprep.subr.mxu0 0.0
        %1109 = vmatpush1.msra.mxu0 0.0
        %1110 = vmatprep.subr.mxu0 0.0
        %1111 = vmatpush1.msra.mxu0 0.0
        %1112 = vmatprep.subr.mxu0 0.0
        %1113 = vmatpush1.msra.mxu0 0.0
        %1114 = vmatprep.subr.mxu0 0.0
        %1115 = vmatpush1.msra.mxu0 0.0
        %1116 = vmatprep.subr.mxu0 0.0
        %1117 = vmatpush1.msra.mxu0 0.0
        %1118 = vmatprep.subr.mxu0 0.0
        %1119 = vmatpush1.msra.mxu0 0.0
        %1120 = vmatprep.subr.mxu0 0.0
        %1121 = vmatpush1.msra.mxu0 0.0
        %1122 = vmatprep.subr.mxu0 0.0
        %1123 = vmatpush1.msra.mxu0 0.0
        %1124 = vmatprep.subr.mxu0 0.0
        %1125 = vmatpush1.msra.mxu0 0.0
        %1126 = vmatprep.subr.mxu0 0.0
        %1127 = vmatpush1.msra.mxu0 0.0
        %1128 = vmatprep.subr.mxu0 0.0
        %1129 = vmatpush1.msra.mxu0 0.0
        %1130 = vmatprep.subr.mxu0 0.0
        %1131 = vmatpush1.msra.mxu0 0.0
        %1132 = vmatprep.subr.mxu0 0.0
        %1133 = vmatpush1.msra.mxu0 0.0
        %1134 = vmatprep.subr.mxu0 0.0
        %1135 = vmatpush1.msra.mxu0 0.0
        %1136 = vmatprep.subr.mxu0 0.0
        %1137 = vmatpush1.msra.mxu0 0.0
        %1138 = vmatprep.subr.mxu0 0.0
        %1139 = vmatpush1.msra.mxu0 0.0
        %1140 = vmatprep.subr.mxu0 0.0
        %1141 = vmatpush1.msra.mxu0 0.0
        %1142 = vmatprep.subr.mxu0 0.0
        %1143 = vmatpush1.msra.mxu0 0.0
        %1144 = vmatprep.subr.mxu0 0.0
        %1145 = vmatpush1.msra.mxu0 0.0
        %1146 = vmatprep.subr.mxu0 0.0
        %1147 = vmatpush1.msra.mxu0 0.0
        %1148 = vmatprep.subr.mxu0 0.0
        %1149 = vmatpush1.msra.mxu0 0.0
        %1150 = vmatprep.subr.mxu0 0.0
        %1151 = vmatpush1.msra.mxu0 0.0
        %1152 = vmatprep.subr.mxu0 0.0
        %1153 = vmatpush1.msra.mxu0 0.0
        %1154 = vmatprep.subr.mxu0 0.0
        %1155 = vmatpush1.msra.mxu0 0.0
        %1156 = vmatprep.subr.mxu0 0.0
        %1157 = vmatpush1.msra.mxu0 0.0
        %1158 = vmatprep.mubr.f32.mxu0 0.0
        %1159 = vmatmul.mubr.f32.gmra.mrb[0].mxu0 %v1092
        %v1160 = vpop.f32.mrb[0].mxu0
        %v1161 = vadd.f32 0.0, %v1160
        %v1162 = vpop.f32.mrb[0].mxu0
        %1163 = vdwg.mxu0
        %1165 = vrot.lane.b32.xlu0 %v831, 8
        %v1166 = vpop.permute.xlu0 %1165
        %1169 = vrot.lane.b32.xlu0 %v996, 16
        %v1170 = vpop.permute.xlu0 %1169
        %1173 = vrot.lane.b32.xlu0 %v1161, 24
        %v1174 = vpop.permute.xlu0 %1173
        %v1176 = vsel %vm505, %v666, %v1166
        %vm1177 = vcmask 130048
        %v1178 = vsel %vm1177, %v1176, %v1170
        %vm1179 = vcmask 195584
        %v1180 = vsel %vm1179, %v1178, %v1174
        %1181 = vst.msk [vmem:[%s332] sm:$0xff] %vm346, %v1180
        %s1182 = sand.u32 %s171, 1
        %s1183 = scalar_lea.sflag [#allocation4], %s1182
        %s1184 = sand.u32 %s171, 1
        %s1185 = smul.addr %s1184, 8
        %s1186 = scalar_lea.vmem [#allocation10], %s1185
        // Predicated region
        $region61: #{tpu_custom_call.1} parent=43 // pred_check
          %p1187 = pneg %p181
        $region62: #{tpu_custom_call.1} parent=43 // pred_check_branch
          %1189 = sbr.rel (%p1187) target = $region64
        $region63: #{tpu_custom_call.1} parent=43 // pred_region
          %s1191 = ssub.s32 128, 128
          %1192 = vsyncadd %s1183, %s1191
          %s1193 = smul.addr %s27, 128
          %s1194 = scalar_lea.hbm %s6, %s1193
          %s1196 = sshll.u32 %s1186, 4
          %s1197 = int_to_ptr.vmem [resolvable:$true] %s1196
          %1199 = dma.vmem_to_hbm [thread:$0]  %s1197, 128, %s1194, %s1183
        $region64: #{tpu_custom_call.1} parent=43 // pred_fallthru
          _
      $region44: #{tpu_custom_call.1} parent=5 // pred_fallthru
        _
      %p1200 = scmp.le.s32.totalorder 2, %s22
      // Predicated region
      $region65: #{tpu_custom_call.1} parent=5 // pred_check
        %p1201 = pneg %p1200
      $region66: #{tpu_custom_call.1} parent=5 // pred_check_branch
        %1203 = sbr.rel (%p1201) target = $region68
      $region67: #{tpu_custom_call.1} parent=5 // pred_region
        %s1204 = ssub.s32 %s22, 2
        // Predicated region
        $region69: #{tpu_custom_call.1} parent=67 // pred_check
          %p1205 = pneg %p187
        $region70: #{tpu_custom_call.1} parent=67 // pred_check_branch
          %1207 = sbr.rel (%p1205) target = $region72
        $region71: #{tpu_custom_call.1} parent=67 // pred_region
          %s1208 = sand.u32 %s172, 1
          %s1209 = scalar_lea.sflag [#allocation4], %s1208
          %s1210 = sand.u32 %s172, 1
          %s1211 = smul.addr %s1210, 8
          %s1212 = scalar_lea.vmem [#allocation10], %s1211
          %1213 = dma.done %s1209, 128
        $region72: #{tpu_custom_call.1} parent=67 // pred_fallthru
          _
      $region68: #{tpu_custom_call.1} parent=5 // pred_fallthru
        _
    $region6: #{tpu_custom_call.1} parent=1 // loop_footer
      %s26 = sadd.s32 1, %s22
    $region7: #{tpu_custom_call.1} parent=1 // loop_footer_branch
      %21 = sbr.rel target = $region3
    $region8: #{tpu_custom_call.1} parent=1 // loop_exit
      _
    %1214 = vsyncpa [#allocation3], 1
    %s1215 = scalar_lea.sflag [#allocation3], 1
    %1216 = vsyncpa %s1215, 1
    %1217 = vsyncpa [#allocation6], 1
    %s1218 = scalar_lea.sflag [#allocation6], 1
    %1219 = vsyncpa %s1218, 1
    %1220 = vsyncpa [#allocation9], 1
    %1221 = vsyncpa [#allocation4], 1
    %s1222 = scalar_lea.sflag [#allocation4], 1
    %1223 = vsyncpa %s1222, 1

</llo_original>
